<compile_context>
chip_gen: v7x
topology: tpu7x:2x2x1
jax: 0.10.0
libtpu: 0.0.40
codegen_flags: <defaults>
</compile_context>

<pallas_src>
import math
import functools

import numpy as np
import jax
import jax.numpy as jnp
from jax.experimental import pallas as pl
from jax.experimental.pallas import tpu as pltpu


# ---------------------------------------------------------------------------
# Resampling-matrix construction (tiny constant matrices, plain numpy, cached).
# ---------------------------------------------------------------------------
def nearest_matrix(in_size: int, out_size: int, scale=None) -> np.ndarray:
    """M (out,in) s.t. M @ v == F.interpolate(v, mode='nearest') along one axis.

    With `scale` given uses PyTorch's scale_factor convention src=floor(dst/scale)
    (recompute_scale_factor=None/False, the modern default); otherwise the
    size=... path floor(dst*in/out)."""
    dst = np.arange(out_size)
    if scale is not None:
        src = np.floor(dst / float(scale)).astype(np.int64)
    else:
        src = np.floor(dst * in_size / out_size).astype(np.int64)
    src = np.clip(src, 0, in_size - 1)
    M = np.zeros((out_size, in_size), dtype=np.float32)
    M[np.arange(out_size), src] = 1.0
    return M


def bilinear_matrix(in_size: int, out_size: int) -> np.ndarray:
    """M (out,in) s.t. M @ v == F.interpolate(v, mode='bilinear',
    align_corners=False) along one axis (PyTorch area-pixel convention)."""
    scale = in_size / out_size
    dst = np.arange(out_size, dtype=np.float64)
    src = (dst + 0.5) * scale - 0.5
    src = np.maximum(src, 0.0)
    lo = np.minimum(np.floor(src).astype(np.int64), in_size - 1)
    hi = np.minimum(lo + 1, in_size - 1)
    frac = src - lo
    M = np.zeros((out_size, in_size), dtype=np.float32)
    M[np.arange(out_size), lo] += (1.0 - frac).astype(np.float32)
    M[np.arange(out_size), hi] += frac.astype(np.float32)
    return M


@functools.lru_cache(maxsize=64)
def _axis_matrices(H, W, H2, W2, scale):
    Nh = nearest_matrix(H, H2, scale)      # (H2, H)
    Nw = nearest_matrix(W, W2, scale)      # (W2, W)
    Bh = bilinear_matrix(H2, H)            # (H,  H2)
    Bw = bilinear_matrix(W2, W)            # (W,  W2)
    return Nh, Nw, Bh, Bw


@functools.lru_cache(maxsize=64)
def _fused_kron_matrices(H, W, H2, W2, scale):
    Nh, Nw, Bh, Bw = _axis_matrices(H, W, H2, W2, scale)
    knT = np.ascontiguousarray(np.kron(Nh, Nw).T)   # (S,  S2)
    kbT = np.ascontiguousarray(np.kron(Bh, Bw).T)   # (S2, S)
    return knT, kbT


@functools.lru_cache(maxsize=64)
def _combined_axis_matrices(H, W, H2, W2, scale):
    Nh, Nw, Bh, Bw = _axis_matrices(H, W, H2, W2, scale)
    Rh = np.ascontiguousarray(Bh @ Nh)              # (H, H) bilinear∘nearest along H
    RwT = np.ascontiguousarray((Bw @ Nw).T)         # (W, W) bilinear∘nearest along W, transposed
    return Rh, RwT


# ---------------------------------------------------------------------------
# Small helpers (tiling / padding / VMEM budgeting).
# ---------------------------------------------------------------------------
def _round_up(v, m):
    return -(-v // m) * m


def _vmem_capacity():
    try:
        cap = int(getattr(pltpu.get_tpu_info(), "vmem_capacity_bytes"))
        if cap > 0:
            return cap
    except Exception:
        pass
    return 64 * 1024 * 1024   # conservative fallback = v7x per-TC VMEM


def _clamp_vmem(need, cap):
    limit = int(1.25 * need) + (4 << 20)
    limit = max(limit, 16 << 20)
    return min(limit, int(0.75 * cap))   # leave headroom (esp. v7x's 64 MiB)


def _pick_images_per_block(N, Cin, Cout, S, itemsize, max_block_bytes):
    """Images per grid block: largest divisor of N whose padded in+out block
    (double-buffered) fits the byte cap; prefer choices that keep >=2 grid
    steps so the parallel grid axis can be split across v7x's two cores."""
    fitting = []
    for nb in range(1, N + 1):
        if N % nb:
            continue
        ri = _round_up(nb * Cin, 8)
        ro = _round_up(nb * Cout, 8)
        if 2 * (ri + ro) * S * itemsize <= max_block_bytes:
            fitting.append(nb)
    if not fitting:
        return 1
    multi_step = [nb for nb in fitting if N // nb >= 2]
    return max(multi_step) if multi_step else max(fitting)


def _pick_spatial_tile(S, rows, itemsize, max_bytes):
    if 2 * rows * S * itemsize <= max_bytes:
        return S
    best = None
    for d in range(128, S, 128):
        if S % d == 0 and 2 * rows * d * itemsize <= max_bytes:
            best = d
    return best if best is not None else S   # full dim is always legal


def _pick_planes_per_block(n_planes, H, W, itemsize, max_bytes):
    best = 1
    for p in range(1, min(n_planes, 8) + 1):
        if n_planes % p == 0 and 4 * p * H * W * itemsize <= max_bytes:
            best = p
    return best


# ---------------------------------------------------------------------------
# Kernels.
# ---------------------------------------------------------------------------
def _fused_kernel_conv_first(x_ref, wbd_ref, b_ref, knT_ref, kbT_ref, o_ref):
    # x:(Rin,S)  wbd:(Rout,Rin)  b:(Rout,1)  knT:(S,S2)  kbT:(S2,S)  o:(Rout,S)
    z = jnp.dot(wbd_ref[...], x_ref[...], preferred_element_type=jnp.float32)
    z = jnp.maximum(z + b_ref[...], 0.0)
    t = jnp.dot(z.astype(knT_ref.dtype), knT_ref[...],
                preferred_element_type=jnp.float32)
    y = jnp.dot(t.astype(kbT_ref.dtype), kbT_ref[...],
                preferred_element_type=jnp.float32)
    o_ref[...] = y.astype(o_ref.dtype)


def _fused_kernel_resize_first(x_ref, wbd_ref, b_ref, knT_ref, kbT_ref, o_ref):
    # Original op order (used when Cout > Cin): nearest -> conv -> ReLU -> bilinear.
    t = jnp.dot(x_ref[...], knT_ref[...], preferred_element_type=jnp.float32)
    z = jnp.dot(wbd_ref[...], t.astype(wbd_ref.dtype),
                preferred_element_type=jnp.float32)
    z = jnp.maximum(z + b_ref[...], 0.0)
    y = jnp.dot(z.astype(kbT_ref.dtype), kbT_ref[...],
                preferred_element_type=jnp.float32)
    o_ref[...] = y.astype(o_ref.dtype)


def _conv_relu_kernel(x_ref, wbd_ref, b_ref, o_ref):
    # x:(Rin,St)  wbd:(Rout,Rin)  b:(Rout,1)  o:(Rout,St)
    z = jnp.dot(wbd_ref[...], x_ref[...], preferred_element_type=jnp.float32)
    z = jnp.maximum(z + b_ref[...], 0.0)
    o_ref[...] = z.astype(o_ref.dtype)


def _plane_resize_kernel(z_ref, rh_ref, rwT_ref, o_ref, *, planes):
    # z:(1,P,H,W)  rh:(H,H)  rwT:(W,W)  o:(1,P,H,W); y_p = Rh @ z_p @ RwT.
    for p in range(planes):
        t = jnp.dot(rh_ref[...], z_ref[0, p].astype(rh_ref.dtype),
                    preferred_element_type=jnp.float32)
        y = jnp.dot(t, rwT_ref[...], preferred_element_type=jnp.float32)
        o_ref[0, p] = y.astype(o_ref.dtype)


# ---------------------------------------------------------------------------
# Wrapper.
# ---------------------------------------------------------------------------
def segmentation_scale_forward(x, conv_w, conv_b, scale, compute_dtype=None):
    """Eval-mode forward of SegmentationScale(model=Conv1x1+ReLU, scale). NCHW.

    compute_dtype: optionally feed the MXU a narrower dtype (e.g. jnp.bfloat16 on
    v6e/v7x); bilinear weights and accumulation stay f32.  Default = x.dtype.
    """
    N, Cin, H, W = x.shape
    Cout = conv_w.shape[0]
    H2 = int(math.floor(H * scale))
    W2 = int(math.floor(W * scale))
    S, S2 = H * W, H2 * W2

    cdt = jnp.dtype(compute_dtype) if compute_dtype is not None else jnp.dtype(x.dtype)
    itemsize = cdt.itemsize
    vmem_cap = _vmem_capacity()

    NB = _pick_images_per_block(N, Cin, Cout, max(S, S2), itemsize,
                                max_block_bytes=min(32 << 20, vmem_cap // 6))
    steps = N // NB
    rows_in, rows_out = NB * Cin, NB * Cout
    rows_in_p, rows_out_p = _round_up(rows_in, 8), _round_up(rows_out, 8)

    # conv/bias/ReLU commute exactly with the nearest resize (a pure gather);
    # doing them first shrinks the dominant resize matmul when Cout <= Cin.
    conv_first = Cout <= Cin

    # Path gate: the fused Kronecker matrices cost ~2*S*S2 elements (x2 for the
    # default double-buffering) — only use them when they fit comfortably.
    fused_need = (2 * (S * S2 + S2 * S) * itemsize
                  + 2 * (rows_in_p + rows_out_p) * max(S, S2) * itemsize
                  + 2 * rows_out_p * max(S, S2) * 4
                  + 2 * rows_out_p * rows_in_p * itemsize)
    use_fused = fused_need <= int(0.45 * vmem_cap)

    # Lane-dense, sublane-aligned input slab (free reshapes + a zero row pad).
    x2 = x.astype(cdt).reshape(steps, rows_in, S)
    if rows_in_p != rows_in:
        x2 = jnp.pad(x2, ((0, 0), (0, rows_in_p - rows_in), (0, 0)))
    x2 = x2.reshape(steps * rows_in_p, S)

    # Block-diagonal 1x1-conv weights + bias, zero-padded to aligned rows.
    wbd = jnp.kron(jnp.eye(NB, dtype=cdt), conv_w.astype(cdt))
    wbd = jnp.pad(wbd, ((0, rows_out_p - rows_out), (0, rows_in_p - rows_in)))
    bcol = jnp.pad(jnp.tile(conv_b.astype(jnp.float32), NB),
                   (0, rows_out_p - rows_out)).reshape(rows_out_p, 1)

    if use_fused:
        # ---------------- fused small-shape fast path -----------------------
        knT_np, kbT_np = _fused_kron_matrices(H, W, H2, W2, float(scale))
        knT = jnp.asarray(knT_np, dtype=cdt)            # nearest: 0/1 entries, exact
        kbT = jnp.asarray(kbT_np, dtype=jnp.float32)    # keep bilinear taps in f32
        kernel = _fused_kernel_conv_first if conv_first else _fused_kernel_resize_first

        flops = (2 * N * Cout * Cin * (S if conv_first else S2)
                 + 2 * N * (Cout if conv_first else Cin) * S * S2
                 + 2 * N * Cout * S2 * S)
        bytes_accessed = (steps * (rows_in_p + rows_out_p) * S * itemsize
                          + S * S2 * itemsize + S2 * S * 4
                          + rows_out_p * (rows_in_p + 1) * itemsize)

        out2 = pl.pallas_call(
            kernel,
            out_shape=jax.ShapeDtypeStruct((steps * rows_out_p, S), cdt),
            grid=(steps,),
            in_specs=[
                pl.BlockSpec((rows_in_p, S), lambda n: (n, 0)),
                pl.BlockSpec((rows_out_p, rows_in_p), lambda n: (0, 0)),
                pl.BlockSpec((rows_out_p, 1), lambda n: (0, 0)),
                pl.BlockSpec((S, S2), lambda n: (0, 0)),
                pl.BlockSpec((S2, S), lambda n: (0, 0)),
            ],
            out_specs=pl.BlockSpec((rows_out_p, S), lambda n: (n, 0)),
            compiler_params=pltpu.CompilerParams(
                dimension_semantics=("parallel",),
                vmem_limit_bytes=_clamp_vmem(fused_need, vmem_cap)),
            cost_estimate=pl.CostEstimate(flops=int(flops), transcendentals=0,
                                          bytes_accessed=int(bytes_accessed)),
        )(x2, wbd, bcol, knT, kbT)

        out = out2.reshape(steps, rows_out_p, S)[:, :rows_out, :]
        return out.reshape(N, Cout, H, W).astype(x.dtype)

    # ---------------- separable primary path (large H, W) -------------------
    # Stage 1: 1x1 conv + bias + ReLU at full resolution, spatially tiled.
    # TODO(synk): when Cout >> Cin it is cheaper to run the conv at the
    # downscaled resolution (original op order) at the cost of a separate
    # nearest-resize kernel stage; not implemented — conv-first is always exact.
    S_t = _pick_spatial_tile(S, rows_in_p + rows_out_p, itemsize,
                             max_bytes=min(16 << 20, vmem_cap // 8))
    n_st = S // S_t
    conv_need = (2 * (rows_in_p + rows_out_p) * S_t * itemsize
                 + 2 * rows_out_p * rows_in_p * itemsize
                 + 2 * rows_out_p * S_t * 4)

    z2 = pl.pallas_call(
        _conv_relu_kernel,
        out_shape=jax.ShapeDtypeStruct((steps * rows_out_p, S), cdt),
        grid=(steps, n_st),
        in_specs=[
            pl.BlockSpec((rows_in_p, S_t), lambda i, j: (i, j)),
            pl.BlockSpec((rows_out_p, rows_in_p), lambda i, j: (0, 0)),
            pl.BlockSpec((rows_out_p, 1), lambda i, j: (0, 0)),
        ],
        out_specs=pl.BlockSpec((rows_out_p, S_t), lambda i, j: (i, j)),
        compiler_params=pltpu.CompilerParams(
            dimension_semantics=("parallel", "parallel"),
            vmem_limit_bytes=_clamp_vmem(conv_need, vmem_cap)),
        cost_estimate=pl.CostEstimate(
            flops=int(2 * N * Cout * Cin * S), transcendentals=0,
            bytes_accessed=int(steps * (rows_in_p + rows_out_p) * S * itemsize)),
    )(x2, wbd, bcol)

    # Stage 2: combined (bilinear ∘ nearest) per-axis resize, per output plane:
    # y = Rh @ plane @ RwT — two small (H,H)/(W,W) matmuls, true separable FLOPs.
    Rh_np, RwT_np = _combined_axis_matrices(H, W, H2, W2, float(scale))
    Rh = jnp.asarray(Rh_np, dtype=jnp.float32)
    RwT = jnp.asarray(RwT_np, dtype=jnp.float32)

    z4 = z2.reshape(steps, rows_out_p, H, W)            # free reshape; pad rows skipped below
    P = _pick_planes_per_block(rows_out, H, W, itemsize,
                               max_bytes=min(8 << 20, vmem_cap // 16))
    nq = rows_out // P
    resize_need = 4 * P * H * W * itemsize + 2 * (H * H + W * W) * 4 + 2 * P * H * W * 4

    y4 = pl.pallas_call(
        functools.partial(_plane_resize_kernel, planes=P),
        out_shape=jax.ShapeDtypeStruct((steps, rows_out, H, W), cdt),
        grid=(steps, nq),
        in_specs=[
            pl.BlockSpec((1, P, H, W), lambda i, q: (i, q, 0, 0)),
            pl.BlockSpec((H, H), lambda i, q: (0, 0)),
            pl.BlockSpec((W, W), lambda i, q: (0, 0)),
        ],
        out_specs=pl.BlockSpec((1, P, H, W), lambda i, q: (i, q, 0, 0)),
        compiler_params=pltpu.CompilerParams(
            dimension_semantics=("parallel", "parallel"),
            vmem_limit_bytes=_clamp_vmem(resize_need, vmem_cap)),
        cost_estimate=pl.CostEstimate(
            flops=int(2 * N * Cout * (H * H * W + H * W * W)), transcendentals=0,
            bytes_accessed=int(2 * N * Cout * S * itemsize + (H * H + W * W) * 4)),
    )(z4, Rh, RwT)

    return y4.reshape(N, Cout, H, W).astype(x.dtype)


# ---------------------------------------------------------------------------
# Pure-JAX reference (separable einsum formulation, original op order).
# ---------------------------------------------------------------------------
def reference_forward(x, conv_w, conv_b, scale):
    N, Cin, H, W = x.shape
    Cout = conv_w.shape[0]
    H2 = int(math.floor(H * scale))
    W2 = int(math.floor(W * scale))
    Nh = jnp.asarray(nearest_matrix(H, H2, scale))
    Nw = jnp.asarray(nearest_matrix(W, W2, scale))
    Bh = jnp.asarray(bilinear_matrix(H2, H))
    Bw = jnp.asarray(bilinear_matrix(W2, W))
    t = jnp.einsum('ah,nchw->ncaw', Nh, x)
    t = jnp.einsum('bw,ncaw->ncab', Nw, t)
    z = jnp.einsum('oc,ncab->noab', conv_w, t) + conv_b.reshape(1, Cout, 1, 1)
    z = jnp.maximum(z, 0.0)
    u = jnp.einsum('ha,noab->nohb', Bh, z)
    u = jnp.einsum('wb,nohb->nohw', Bw, u)
    return u


if __name__ == "__main__":
    key = jax.random.PRNGKey(0)
    # (N, Cin, Cout, H, W, scale): first exercises the fused small-shape fast
    # path, second the separable primary path.
    cases = [(2, 4, 3, 16, 16, 0.5),
             (2, 4, 3, 64, 64, 0.5)]
    for (N, Cin, Cout, H, W, scale) in cases:
        key, kx, kw, kb = jax.random.split(key, 4)
        x = jax.random.normal(kx, (N, Cin, H, W), dtype=jnp.float32)
        conv_w = 0.1 * jax.random.normal(kw, (Cout, Cin), dtype=jnp.float32)
        conv_b = 0.1 * jax.random.normal(kb, (Cout,), dtype=jnp.float32)

        out = segmentation_scale_forward(x, conv_w, conv_b, scale)
        out = jax.block_until_ready(out)

        ref = reference_forward(x, conv_w, conv_b, scale)
        ref = jax.block_until_ready(ref)
        np.testing.assert_allclose(np.asarray(out), np.asarray(ref),
                                   rtol=1e-4, atol=1e-5)
    print("KERNEL_OK")
</pallas_src>

<mosaic_0001>
module attributes {stable_mosaic.version = 11 : i64} {
  func.func @_fused_kernel_conv_first(%arg0: i32, %arg1: memref<8x256xf32, #tpu.memory_space<vmem>>, %arg2: memref<8x8xf32, #tpu.memory_space<vmem>>, %arg3: memref<8x1xf32, #tpu.memory_space<vmem>>, %arg4: memref<256x64xf32, #tpu.memory_space<vmem>>, %arg5: memref<64x256xf32, #tpu.memory_space<vmem>>, %arg6: memref<8x256xf32, #tpu.memory_space<vmem>>) attributes {dimension_semantics = [#tpu.dimension_semantics<parallel>], iteration_bounds = array<i64: 2>, scalar_prefetch = 0 : i64, scratch_operands = 0 : i64, tpu.core_type = #tpu.core_type<tc>, window_params = [{transform_indices = @transform_0, window_bounds = array<i64: 8, 256>}, {pipeline_mode = #tpu.pipeline_mode<synchronous>, transform_indices = @transform_1, window_bounds = array<i64: 8, 8>}, {pipeline_mode = #tpu.pipeline_mode<synchronous>, transform_indices = @transform_2, window_bounds = array<i64: 8, 1>}, {pipeline_mode = #tpu.pipeline_mode<synchronous>, transform_indices = @transform_3, window_bounds = array<i64: 256, 64>}, {pipeline_mode = #tpu.pipeline_mode<synchronous>, transform_indices = @transform_4, window_bounds = array<i64: 64, 256>}, {transform_indices = @transform_5, window_bounds = array<i64: 8, 256>}]} {
    %c0 = arith.constant 0 : index
    %c0_0 = arith.constant 0 : index
    %0 = vector.load %arg2[%c0, %c0_0] : memref<8x8xf32, #tpu.memory_space<vmem>>, vector<8x8xf32>
    %c0_1 = arith.constant 0 : index
    %c0_2 = arith.constant 0 : index
    %1 = vector.load %arg1[%c0_1, %c0_2] : memref<8x256xf32, #tpu.memory_space<vmem>>, vector<8x256xf32>
    %cst = arith.constant dense<0.000000e+00> : vector<8x256xf32>
    %2 = tpu.matmul %0, %1, %cst {dimension_numbers = #tpu.dot_dimension_numbers<[1], [0], [0], [1], [0, 0, 1, 1], [], []>} : vector<8x8xf32>, vector<8x256xf32>, vector<8x256xf32> -> vector<8x256xf32>
    %c0_3 = arith.constant 0 : index
    %c0_4 = arith.constant 0 : index
    %3 = vector.load %arg3[%c0_3, %c0_4] : memref<8x1xf32, #tpu.memory_space<vmem>>, vector<8x1xf32>
    %4 = vector.broadcast %3 : vector<8x1xf32> to vector<8x256xf32>
    %5 = arith.addf %2, %4 : vector<8x256xf32>
    %cst_5 = arith.constant 0.000000e+00 : f32
    %6 = vector.broadcast %cst_5 : f32 to vector<8x256xf32>
    %7 = arith.maximumf %5, %6 : vector<8x256xf32>
    %c0_6 = arith.constant 0 : index
    %c0_7 = arith.constant 0 : index
    %8 = vector.load %arg4[%c0_6, %c0_7] : memref<256x64xf32, #tpu.memory_space<vmem>>, vector<256x64xf32>
    %cst_8 = arith.constant dense<0.000000e+00> : vector<8x64xf32>
    %9 = tpu.matmul %7, %8, %cst_8 {dimension_numbers = #tpu.dot_dimension_numbers<[1], [0], [0], [1], [0, 0, 1, 1], [], []>} : vector<8x256xf32>, vector<256x64xf32>, vector<8x64xf32> -> vector<8x64xf32>
    %c0_9 = arith.constant 0 : index
    %c0_10 = arith.constant 0 : index
    %10 = vector.load %arg5[%c0_9, %c0_10] : memref<64x256xf32, #tpu.memory_space<vmem>>, vector<64x256xf32>
    %cst_11 = arith.constant dense<0.000000e+00> : vector<8x256xf32>
    %11 = tpu.matmul %9, %10, %cst_11 {dimension_numbers = #tpu.dot_dimension_numbers<[1], [0], [0], [1], [0, 0, 1, 1], [], []>} : vector<8x64xf32>, vector<64x256xf32>, vector<8x256xf32> -> vector<8x256xf32>
    %c0_12 = arith.constant 0 : index
    %c0_13 = arith.constant 0 : index
    %12 = vector.load %arg6[%c0_12, %c0_13] : memref<8x256xf32, #tpu.memory_space<vmem>>, vector<8x256xf32>
    tpu.vector_store %arg6[%c0_12, %c0_13], %11 {strides = array<i32>} : memref<8x256xf32, #tpu.memory_space<vmem>>, vector<8x256xf32>,
    return
  }
  func.func @transform_0(%arg0: i32) -> (i32, i32) {
    %c0_i32 = arith.constant 0 : i32
    %c0_i32_0 = arith.constant 0 : i32
    return %arg0, %c0_i32 : i32, i32
  }
  func.func @transform_1(%arg0: i32) -> (i32, i32) {
    %c0_i32 = arith.constant 0 : i32
    %c0_i32_0 = arith.constant 0 : i32
    %c0_i32_1 = arith.constant 0 : i32
    return %c0_i32, %c0_i32_0 : i32, i32
  }
  func.func @transform_2(%arg0: i32) -> (i32, i32) {
    %c0_i32 = arith.constant 0 : i32
    %c0_i32_0 = arith.constant 0 : i32
    %c0_i32_1 = arith.constant 0 : i32
    return %c0_i32, %c0_i32_0 : i32, i32
  }
  func.func @transform_3(%arg0: i32) -> (i32, i32) {
    %c0_i32 = arith.constant 0 : i32
    %c0_i32_0 = arith.constant 0 : i32
    %c0_i32_1 = arith.constant 0 : i32
    return %c0_i32, %c0_i32_0 : i32, i32
  }
  func.func @transform_4(%arg0: i32) -> (i32, i32) {
    %c0_i32 = arith.constant 0 : i32
    %c0_i32_0 = arith.constant 0 : i32
    %c0_i32_1 = arith.constant 0 : i32
    return %c0_i32, %c0_i32_0 : i32, i32
  }
  func.func @transform_5(%arg0: i32) -> (i32, i32) {
    %c0_i32 = arith.constant 0 : i32
    %c0_i32_0 = arith.constant 0 : i32
    return %arg0, %c0_i32 : i32, i32
  }
}

</mosaic_0001>

<llo_original>
// kernel: tpu_custom_call.1
$region0: #{tpu_custom_call.1}
  #allocation0 [shape = 'u32[]', space=smem, size = 0x4, offset = 0x4, fixed_abs, tag = 'smem constant byte address 0x4 - core index']
  #allocation1 [shape = 'u32[144,128]{1,0:T(1,128)}', space=vmem, size = 0x12000, scoped, tag = 'internal scratch']
  %s0 = inlined_call_operand.vmem [shape: f32[16,256], index: 0, kind: input, shape index: {}]
  %s1 = inlined_call_operand.vmem [shape: f32[8,8], index: 1, kind: input, shape index: {}]
  %s2 = inlined_call_operand.vmem [shape: f32[8,1], index: 2, kind: input, shape index: {}]
  %s3 = inlined_call_operand.vmem [shape: f32[256,64], index: 3, kind: input, shape index: {}]
  %s4 = inlined_call_operand.vmem [shape: f32[64,256], index: 4, kind: input, shape index: {}]
  %s5 = inlined_call_operand.hbm [shape: f32[16,256], index: 5, kind: output, shape index: {}]
  %s6 = sld [smem:[#allocation0]]
  $region53: #{tpu_custom_call.1} parent=0
    _
  %s8 = ssub.s32 1, %s6
  %s9 = scalar_select 0, %s8, %s6
  $region1: #{tpu_custom_call.1} parent=0
    #allocation2 [shape = 'u8[16384]{0}', space=vmem, size = 0x4000, scoped, tag = 'output window, operand 0']
    #allocation3 [shape = 's32[2]{0}', space=sflag, size = 0x8, scoped, tag = 'scoped memory for tpu_custom_call.1']
    %10 = vsyncpa [#allocation3], 0
    %s11 = scalar_lea.sflag [#allocation3], 1
    %12 = vsyncpa %s11, 0
    loop: start=0, step=1, limit=4
    $region2: #{tpu_custom_call.1} parent=1 // loop_pre_header
      _
    $region3: #{tpu_custom_call.1} parent=1 // loop_header
      %s14 = sphi 0, %s18
      %p15 = scmp.ge.s32.totalorder %s14, 4
      %s24 = sphi 0, %s26
      %s27 = sphi 0, %s24
      %s28 = sphi 0, %s27
      %s44 = sphi 0, %s28
      %s48 = sphi 0, %s48
      %s50 = sphi 0, %s48
      %s51 = sphi 0, %s50
      %s65 = sphi 0, %s51
      %s69 = sphi 0, %s69
      %s71 = sphi 0, %s69
      %s72 = sphi 0, %s71
      %s86 = sphi 0, %s72
      %s90 = sphi 0, %s90
      %s92 = sphi 0, %s90
      %s93 = sphi 0, %s92
      %s107 = sphi 0, %s93
      %s111 = sphi 0, %s111
      %s113 = sphi 0, %s111
      %s114 = sphi 0, %s113
      %s128 = sphi 0, %s114
      %s134 = sphi 0, %s136
      %s137 = sphi 0, %s134
      %s138 = sphi 0, %s137
      %s154 = sphi 0, %s138
    $region4: #{tpu_custom_call.1} parent=1 // loop_header_branch
      %17 = sbr.rel (%p15) target = $region8
    $region5: #{tpu_custom_call.1} parent=1 // loop_body
      %s19 = ssub.s32 %s14, 1
      %s20 = ssub.s32 %s14, 2
      %s21 = sadd.s32 %s14, 1
      %s22 = ssub.s32 %s14, %s21
      %p23 = scmp.eq.s32.totalorder %s22, 0
      %s25 = sadd.s32 %s24, 1
      %s26 = scalar_select %p23, %s24, %s25
      %p29 = pneg %p23
      %p30 = scmp.eq.s32.totalorder %s14, 1
      %p31 = por %p29, %p30
      %p32 = scmp.ne.s32.totalorder %s24, %s27
      %p33 = scmp.eq.s32.totalorder %s14, 0
      %p34 = por %p32, %p33
      %p35 = scmp.ne.s32.totalorder %s24, %s27
      %p36 = scmp.eq.s32.totalorder %s19, 1
      %p37 = por %p35, %p36
      %p38 = scmp.ne.s32.totalorder %s27, %s28
      %p39 = scmp.eq.s32.totalorder %s19, 0
      %p40 = por %p38, %p39
      %p41 = scmp.ne.s32.totalorder %s27, %s28
      %p42 = scmp.eq.s32.totalorder %s20, 1
      %p43 = por %p41, %p42
      %p45 = scmp.ne.s32.totalorder %s28, %s44
      %p46 = scmp.eq.s32.totalorder %s20, 0
      %p47 = por %p45, %p46
      %s49 = sadd.s32 %s48, 1
      %p52 = scmp.eq.s32.totalorder %s14, 1
      %p53 = scmp.ne.s32.totalorder %s48, %s50
      %p54 = scmp.eq.s32.totalorder %s14, 0
      %p55 = por %p53, %p54
      %p56 = scmp.ne.s32.totalorder %s48, %s50
      %p57 = scmp.eq.s32.totalorder %s19, 1
      %p58 = por %p56, %p57
      %p59 = scmp.ne.s32.totalorder %s50, %s51
      %p60 = scmp.eq.s32.totalorder %s19, 0
      %p61 = por %p59, %p60
      %p62 = scmp.ne.s32.totalorder %s50, %s51
      %p63 = scmp.eq.s32.totalorder %s20, 1
      %p64 = por %p62, %p63
      %p66 = scmp.ne.s32.totalorder %s51, %s65
      %p67 = scmp.eq.s32.totalorder %s20, 0
      %p68 = por %p66, %p67
      %s70 = sadd.s32 %s69, 1
      %p73 = scmp.eq.s32.totalorder %s14, 1
      %p74 = scmp.ne.s32.totalorder %s69, %s71
      %p75 = scmp.eq.s32.totalorder %s14, 0
      %p76 = por %p74, %p75
      %p77 = scmp.ne.s32.totalorder %s69, %s71
      %p78 = scmp.eq.s32.totalorder %s19, 1
      %p79 = por %p77, %p78
      %p80 = scmp.ne.s32.totalorder %s71, %s72
      %p81 = scmp.eq.s32.totalorder %s19, 0
      %p82 = por %p80, %p81
      %p83 = scmp.ne.s32.totalorder %s71, %s72
      %p84 = scmp.eq.s32.totalorder %s20, 1
      %p85 = por %p83, %p84
      %p87 = scmp.ne.s32.totalorder %s72, %s86
      %p88 = scmp.eq.s32.totalorder %s20, 0
      %p89 = por %p87, %p88
      %s91 = sadd.s32 %s90, 1
      %p94 = scmp.eq.s32.totalorder %s14, 1
      %p95 = scmp.ne.s32.totalorder %s90, %s92
      %p96 = scmp.eq.s32.totalorder %s14, 0
      %p97 = por %p95, %p96
      %p98 = scmp.ne.s32.totalorder %s90, %s92
      %p99 = scmp.eq.s32.totalorder %s19, 1
      %p100 = por %p98, %p99
      %p101 = scmp.ne.s32.totalorder %s92, %s93
      %p102 = scmp.eq.s32.totalorder %s19, 0
      %p103 = por %p101, %p102
      %p104 = scmp.ne.s32.totalorder %s92, %s93
      %p105 = scmp.eq.s32.totalorder %s20, 1
      %p106 = por %p104, %p105
      %p108 = scmp.ne.s32.totalorder %s93, %s107
      %p109 = scmp.eq.s32.totalorder %s20, 0
      %p110 = por %p108, %p109
      %s112 = sadd.s32 %s111, 1
      %p115 = scmp.eq.s32.totalorder %s14, 1
      %p116 = scmp.ne.s32.totalorder %s111, %s113
      %p117 = scmp.eq.s32.totalorder %s14, 0
      %p118 = por %p116, %p117
      %p119 = scmp.ne.s32.totalorder %s111, %s113
      %p120 = scmp.eq.s32.totalorder %s19, 1
      %p121 = por %p119, %p120
      %p122 = scmp.ne.s32.totalorder %s113, %s114
      %p123 = scmp.eq.s32.totalorder %s19, 0
      %p124 = por %p122, %p123
      %p125 = scmp.ne.s32.totalorder %s113, %s114
      %p126 = scmp.eq.s32.totalorder %s20, 1
      %p127 = por %p125, %p126
      %p129 = scmp.ne.s32.totalorder %s114, %s128
      %p130 = scmp.eq.s32.totalorder %s20, 0
      %p131 = por %p129, %p130
      %s132 = ssub.s32 %s14, %s21
      %p133 = scmp.eq.s32.totalorder %s132, 0
      %s135 = sadd.s32 %s134, 1
      %s136 = scalar_select %p133, %s134, %s135
      %p139 = pneg %p133
      %p140 = scmp.eq.s32.totalorder %s14, 1
      %p141 = por %p139, %p140
      %p142 = scmp.ne.s32.totalorder %s134, %s137
      %p143 = scmp.eq.s32.totalorder %s14, 0
      %p144 = por %p142, %p143
      %p145 = scmp.ne.s32.totalorder %s134, %s137
      %p146 = scmp.eq.s32.totalorder %s19, 1
      %p147 = por %p145, %p146
      %p148 = scmp.ne.s32.totalorder %s137, %s138
      %p149 = scmp.eq.s32.totalorder %s19, 0
      %p150 = por %p148, %p149
      %p151 = scmp.ne.s32.totalorder %s137, %s138
      %p152 = scmp.eq.s32.totalorder %s20, 1
      %p153 = por %p151, %p152
      %p155 = scmp.ne.s32.totalorder %s138, %s154
      %p156 = scmp.eq.s32.totalorder %s20, 0
      %p157 = por %p155, %p156
      %p158 = scmp.le.s32.totalorder 1, %s14
      %p159 = scmp.lt.s32.totalorder %s14, 3
      %p160 = pnand %p158, %p159
      %p161 = pneg %p160
      // Predicated region
      $region9: #{tpu_custom_call.1} parent=5 // pred_check
        _
      $region10: #{tpu_custom_call.1} parent=5 // pred_check_branch
        %163 = sbr.rel (%p160) target = $region12
      $region11: #{tpu_custom_call.1} parent=5 // pred_region
        %s164 = ssub.s32 %s14, 1
        // Predicated region
        $region13: #{tpu_custom_call.1} parent=11 // pred_check
          %p165 = pneg %p61
        $region14: #{tpu_custom_call.1} parent=11 // pred_check_branch
          %167 = sbr.rel (%p165) target = $region16
        $region15: #{tpu_custom_call.1} parent=11 // pred_region
          _
        $region16: #{tpu_custom_call.1} parent=11 // pred_fallthru
          _
        // Predicated region
        $region17: #{tpu_custom_call.1} parent=11 // pred_check
          %p168 = pneg %p82
        $region18: #{tpu_custom_call.1} parent=11 // pred_check_branch
          %170 = sbr.rel (%p168) target = $region20
        $region19: #{tpu_custom_call.1} parent=11 // pred_region
          _
        $region20: #{tpu_custom_call.1} parent=11 // pred_fallthru
          _
        // Predicated region
        $region21: #{tpu_custom_call.1} parent=11 // pred_check
          %p171 = pneg %p103
        $region22: #{tpu_custom_call.1} parent=11 // pred_check_branch
          %173 = sbr.rel (%p171) target = $region24
        $region23: #{tpu_custom_call.1} parent=11 // pred_region
          _
        $region24: #{tpu_custom_call.1} parent=11 // pred_fallthru
          _
        // Predicated region
        $region25: #{tpu_custom_call.1} parent=11 // pred_check
          %p174 = pneg %p124
        $region26: #{tpu_custom_call.1} parent=11 // pred_check_branch
          %176 = sbr.rel (%p174) target = $region28
        $region27: #{tpu_custom_call.1} parent=11 // pred_region
          _
        $region28: #{tpu_custom_call.1} parent=11 // pred_fallthru
          _
      $region12: #{tpu_custom_call.1} parent=5 // pred_fallthru
        _
      %p177 = scmp.lt.s32.totalorder %s14, 2
      // Predicated region
      $region29: #{tpu_custom_call.1} parent=5 // pred_check
        %p178 = pneg %p177
      $region30: #{tpu_custom_call.1} parent=5 // pred_check_branch
        %180 = sbr.rel (%p178) target = $region32
      $region31: #{tpu_custom_call.1} parent=5 // pred_region
        // Predicated region
        $region33: #{tpu_custom_call.1} parent=31 // pred_check
          %p181 = pneg %p34
        $region34: #{tpu_custom_call.1} parent=31 // pred_check_branch
          %183 = sbr.rel (%p181) target = $region36
        $region35: #{tpu_custom_call.1} parent=31 // pred_region
          %p184 = scmp.lt.s32.totalorder %s14, 1
          %s185 = scalar_select %p184, %s14, 1
          %s186 = smul.addr %s185, 2
          %s187 = smul.addr %s186, 8
          %s188 = scalar_lea.vmem %s0, %s187
        $region36: #{tpu_custom_call.1} parent=31 // pred_fallthru
          _
      $region32: #{tpu_custom_call.1} parent=5 // pred_fallthru
        _
      %p189 = scmp.le.s32.totalorder 1, %s14
      %p190 = scmp.lt.s32.totalorder %s14, 3
      %p191 = pnand %p189, %p190
      %p192 = pneg %p191
      // Predicated region
      $region37: #{tpu_custom_call.1} parent=5 // pred_check
        _
      $region38: #{tpu_custom_call.1} parent=5 // pred_check_branch
        %194 = sbr.rel (%p191) target = $region40
      $region39: #{tpu_custom_call.1} parent=5 // pred_region
        %s195 = ssub.s32 %s14, 1
        %p196 = scmp.lt.s32.totalorder %s19, 1
        %s197 = scalar_select %p196, %s19, 1
        %s198 = smul.addr %s197, 2
        %s199 = smul.addr %s198, 8
        %s200 = scalar_lea.vmem %s0, %s199
        %p201 = pneg %p40
        %p202 = pneg %p37
        %p203 = pneg %p61
        %p204 = pneg %p58
        %p205 = pneg %p82
        %p206 = pneg %p79
        %p207 = pneg %p103
        %p208 = pneg %p100
        %p209 = pneg %p124
        %p210 = pneg %p121
        %p211 = pneg %p150
        %p212 = pneg %p147
        %s213 = sand.u32 %s137, 1
        %s214 = scalar_lea.sflag [#allocation3], %s213
        %s215 = sand.u32 %s137, 1
        %s216 = smul.addr %s215, 16
        %s217 = scalar_lea.vmem [#allocation2], %s216
        %p218 = scmp.lt.s32.totalorder %s19, 1
        %s219 = scalar_select %p218, %s19, 1
        %s220 = smul.addr %s219, 2
        %s221 = smul.addr %s220, 8
        %s222 = scalar_lea.vmem %s0, %s221
        %v223 = vld [vmem:[%s1] sm:$0xff]
        %v224 = vld [vmem:[%s222] sm:$0xff]
        %v225 = vld [vmem:[%s222 + $0x8] sm:$0xff]
        %v226 = vld [vmem:[%s2] sm:$0xff]
        %228 = vset.pattern.permute.xlu0 0
        %229 = vperm.xlu0 %228, %v226
        %v230 = vpop.permute.xlu0 %229
        %vm232 = vcmask 64512
        %v234 = vsel %vm232, %v223, 0
        %236 = vmatprep.subr.mxu0 %v225
        %237 = vmatpush1.msra.mxu0 %v224
        %238 = vmatprep.subr.mxu0 0.0
        %239 = vmatpush1.msra.mxu0 0.0
        %240 = vmatprep.subr.mxu0 0.0
        %241 = vmatpush1.msra.mxu0 0.0
        %242 = vmatprep.subr.mxu0 0.0
        %243 = vmatpush1.msra.mxu0 0.0
        %244 = vmatprep.subr.mxu0 0.0
        %245 = vmatpush1.msra.mxu0 0.0
        %246 = vmatprep.subr.mxu0 0.0
        %247 = vmatpush1.msra.mxu0 0.0
        %248 = vmatprep.subr.mxu0 0.0
        %249 = vmatpush1.msra.mxu0 0.0
        %250 = vmatprep.subr.mxu0 0.0
        %251 = vmatpush1.msra.mxu0 0.0
        %252 = vmatprep.subr.mxu0 0.0
        %253 = vmatpush1.msra.mxu0 0.0
        %254 = vmatprep.subr.mxu0 0.0
        %255 = vmatpush1.msra.mxu0 0.0
        %256 = vmatprep.subr.mxu0 0.0
        %257 = vmatpush1.msra.mxu0 0.0
        %258 = vmatprep.subr.mxu0 0.0
        %259 = vmatpush1.msra.mxu0 0.0
        %260 = vmatprep.subr.mxu0 0.0
        %261 = vmatpush1.msra.mxu0 0.0
        %262 = vmatprep.subr.mxu0 0.0
        %263 = vmatpush1.msra.mxu0 0.0
        %264 = vmatprep.subr.mxu0 0.0
        %265 = vmatpush1.msra.mxu0 0.0
        %266 = vmatprep.subr.mxu0 0.0
        %267 = vmatpush1.msra.mxu0 0.0
        %268 = vmatprep.subr.mxu0 0.0
        %269 = vmatpush1.msra.mxu0 0.0
        %270 = vmatprep.subr.mxu0 0.0
        %271 = vmatpush1.msra.mxu0 0.0
        %272 = vmatprep.subr.mxu0 0.0
        %273 = vmatpush1.msra.mxu0 0.0
        %274 = vmatprep.subr.mxu0 0.0
        %275 = vmatpush1.msra.mxu0 0.0
        %276 = vmatprep.subr.mxu0 0.0
        %277 = vmatpush1.msra.mxu0 0.0
        %278 = vmatprep.subr.mxu0 0.0
        %279 = vmatpush1.msra.mxu0 0.0
        %280 = vmatprep.subr.mxu0 0.0
        %281 = vmatpush1.msra.mxu0 0.0
        %282 = vmatprep.subr.mxu0 0.0
        %283 = vmatpush1.msra.mxu0 0.0
        %284 = vmatprep.subr.mxu0 0.0
        %285 = vmatpush1.msra.mxu0 0.0
        %286 = vmatprep.subr.mxu0 0.0
        %287 = vmatpush1.msra.mxu0 0.0
        %288 = vmatprep.subr.mxu0 0.0
        %289 = vmatpush1.msra.mxu0 0.0
        %290 = vmatprep.subr.mxu0 0.0
        %291 = vmatpush1.msra.mxu0 0.0
        %292 = vmatprep.subr.mxu0 0.0
        %293 = vmatpush1.msra.mxu0 0.0
        %294 = vmatprep.subr.mxu0 0.0
        %295 = vmatpush1.msra.mxu0 0.0
        %296 = vmatprep.subr.mxu0 0.0
        %297 = vmatpush1.msra.mxu0 0.0
        %298 = vmatprep.subr.mxu0 0.0
        %299 = vmatpush1.msra.mxu0 0.0
        %300 = vmatprep.mubr.f32.mxu0 0.0
        %301 = vmatmul.mubr.f32.gmra.mrb[0].mxu0 %v234
        %v302 = vpop.f32.mrb[0].mxu0
        %v303 = vadd.f32 %v230, %v302
        %v304 = vpop.f32.mrb[0].mxu0
        %v305 = vadd.f32 %v230, %v304
        %306 = vdwg.mxu0
        %v307 = vmax.f32 %v303, 0.0
        %v308 = vmax.f32 %v305, 0.0
        %v309 = vld [vmem:[%s3] sm:$0xff]
        %v310 = vld [vmem:[%s3 + $0x8] sm:$0xff]
        %v311 = vld [vmem:[%s3 + $0x10] sm:$0xff]
        %v312 = vld [vmem:[%s3 + $0x18] sm:$0xff]
        %v313 = vld [vmem:[%s3 + $0x20] sm:$0xff]
        %v314 = vld [vmem:[%s3 + $0x28] sm:$0xff]
        %v315 = vld [vmem:[%s3 + $0x30] sm:$0xff]
        %v316 = vld [vmem:[%s3 + $0x38] sm:$0xff]
        %v317 = vld [vmem:[%s3 + $0x40] sm:$0xff]
        %v318 = vld [vmem:[%s3 + $0x48] sm:$0xff]
        %v319 = vld [vmem:[%s3 + $0x50] sm:$0xff]
        %v320 = vld [vmem:[%s3 + $0x58] sm:$0xff]
        %v321 = vld [vmem:[%s3 + $0x60] sm:$0xff]
        %v322 = vld [vmem:[%s3 + $0x68] sm:$0xff]
        %v323 = vld [vmem:[%s3 + $0x70] sm:$0xff]
        %v324 = vld [vmem:[%s3 + $0x78] sm:$0xff]
        %v325 = vld [vmem:[%s3 + $0x80] sm:$0xff]
        %v326 = vld [vmem:[%s3 + $0x88] sm:$0xff]
        %v327 = vld [vmem:[%s3 + $0x90] sm:$0xff]
        %v328 = vld [vmem:[%s3 + $0x98] sm:$0xff]
        %v329 = vld [vmem:[%s3 + $0xa0] sm:$0xff]
        %v330 = vld [vmem:[%s3 + $0xa8] sm:$0xff]
        %v331 = vld [vmem:[%s3 + $0xb0] sm:$0xff]
        %v332 = vld [vmem:[%s3 + $0xb8] sm:$0xff]
        %v333 = vld [vmem:[%s3 + $0xc0] sm:$0xff]
        %v334 = vld [vmem:[%s3 + $0xc8] sm:$0xff]
        %v335 = vld [vmem:[%s3 + $0xd0] sm:$0xff]
        %v336 = vld [vmem:[%s3 + $0xd8] sm:$0xff]
        %v337 = vld [vmem:[%s3 + $0xe0] sm:$0xff]
        %v338 = vld [vmem:[%s3 + $0xe8] sm:$0xff]
        %v339 = vld [vmem:[%s3 + $0xf0] sm:$0xff]
        %v340 = vld [vmem:[%s3 + $0xf8] sm:$0xff]
        %341 = vmatprep.subr.mxu0 0.0
        %342 = vmatpush1.msra.mxu0 %v309
        %343 = vmatprep.subr.mxu0 0.0
        %344 = vmatpush1.msra.mxu0 %v310
        %345 = vmatprep.subr.mxu0 0.0
        %346 = vmatpush1.msra.mxu0 %v311
        %347 = vmatprep.subr.mxu0 0.0
        %348 = vmatpush1.msra.mxu0 %v312
        %349 = vmatprep.subr.mxu0 0.0
        %350 = vmatpush1.msra.mxu0 %v313
        %351 = vmatprep.subr.mxu0 0.0
        %352 = vmatpush1.msra.mxu0 %v314
        %353 = vmatprep.subr.mxu0 0.0
        %354 = vmatpush1.msra.mxu0 %v315
        %355 = vmatprep.subr.mxu0 0.0
        %356 = vmatpush1.msra.mxu0 %v316
        %357 = vmatprep.subr.mxu0 0.0
        %358 = vmatpush1.msra.mxu0 %v317
        %359 = vmatprep.subr.mxu0 0.0
        %360 = vmatpush1.msra.mxu0 %v318
        %361 = vmatprep.subr.mxu0 0.0
        %362 = vmatpush1.msra.mxu0 %v319
        %363 = vmatprep.subr.mxu0 0.0
        %364 = vmatpush1.msra.mxu0 %v320
        %365 = vmatprep.subr.mxu0 0.0
        %366 = vmatpush1.msra.mxu0 %v321
        %367 = vmatprep.subr.mxu0 0.0
        %368 = vmatpush1.msra.mxu0 %v322
        %369 = vmatprep.subr.mxu0 0.0
        %370 = vmatpush1.msra.mxu0 %v323
        %371 = vmatprep.subr.mxu0 0.0
        %372 = vmatpush1.msra.mxu0 %v324
        %373 = vmatprep.subr.mxu0 0.0
        %374 = vmatpush1.msra.mxu0 %v325
        %375 = vmatprep.subr.mxu0 0.0
        %376 = vmatpush1.msra.mxu0 %v326
        %377 = vmatprep.subr.mxu0 0.0
        %378 = vmatpush1.msra.mxu0 %v327
        %379 = vmatprep.subr.mxu0 0.0
        %380 = vmatpush1.msra.mxu0 %v328
        %381 = vmatprep.subr.mxu0 0.0
        %382 = vmatpush1.msra.mxu0 %v329
        %383 = vmatprep.subr.mxu0 0.0
        %384 = vmatpush1.msra.mxu0 %v330
        %385 = vmatprep.subr.mxu0 0.0
        %386 = vmatpush1.msra.mxu0 %v331
        %387 = vmatprep.subr.mxu0 0.0
        %388 = vmatpush1.msra.mxu0 %v332
        %389 = vmatprep.subr.mxu0 0.0
        %390 = vmatpush1.msra.mxu0 %v333
        %391 = vmatprep.subr.mxu0 0.0
        %392 = vmatpush1.msra.mxu0 %v334
        %393 = vmatprep.subr.mxu0 0.0
        %394 = vmatpush1.msra.mxu0 %v335
        %395 = vmatprep.subr.mxu0 0.0
        %396 = vmatpush1.msra.mxu0 %v336
        %397 = vmatprep.subr.mxu0 0.0
        %398 = vmatpush1.msra.mxu0 %v337
        %399 = vmatprep.subr.mxu0 0.0
        %400 = vmatpush1.msra.mxu0 %v338
        %401 = vmatprep.subr.mxu0 0.0
        %402 = vmatpush1.msra.mxu0 %v339
        %403 = vmatprep.subr.mxu0 0.0
        %404 = vmatpush1.msra.mxu0 %v340
        %405 = vmatprep.mubr.f32.mxu0 %v308
        %406 = vmatmul.mubr.f32.gmra.mrb[0].mxu0 %v307
        %v407 = vpop.f32.mrb[0].mxu0
        %v408 = vadd.f32 0.0, %v407
        %v409 = vpop.f32.mrb[0].mxu0
        %410 = vdwg.mxu0
        %v411 = vld [vmem:[%s4] sm:$0xff]
        %v412 = vld [vmem:[%s4 + $0x8] sm:$0xff]
        %v413 = vld [vmem:[%s4 + $0x10] sm:$0xff]
        %v414 = vld [vmem:[%s4 + $0x18] sm:$0xff]
        %v415 = vld [vmem:[%s4 + $0x20] sm:$0xff]
        %v416 = vld [vmem:[%s4 + $0x28] sm:$0xff]
        %v417 = vld [vmem:[%s4 + $0x30] sm:$0xff]
        %v418 = vld [vmem:[%s4 + $0x38] sm:$0xff]
        %v419 = vld [vmem:[%s4 + $0x40] sm:$0xff]
        %v420 = vld [vmem:[%s4 + $0x48] sm:$0xff]
        %v421 = vld [vmem:[%s4 + $0x50] sm:$0xff]
        %v422 = vld [vmem:[%s4 + $0x58] sm:$0xff]
        %v423 = vld [vmem:[%s4 + $0x60] sm:$0xff]
        %v424 = vld [vmem:[%s4 + $0x68] sm:$0xff]
        %v425 = vld [vmem:[%s4 + $0x70] sm:$0xff]
        %v426 = vld [vmem:[%s4 + $0x78] sm:$0xff]
        %vm427 = vcmask 523264
        %v429 = vsel %vm427, %v408, 0
        %431 = vmatprep.subr.mxu0 %v412
        %432 = vmatpush1.msra.mxu0 %v411
        %433 = vmatprep.subr.mxu0 %v414
        %434 = vmatpush1.msra.mxu0 %v413
        %435 = vmatprep.subr.mxu0 %v416
        %436 = vmatpush1.msra.mxu0 %v415
        %437 = vmatprep.subr.mxu0 %v418
        %438 = vmatpush1.msra.mxu0 %v417
        %439 = vmatprep.subr.mxu0 %v420
        %440 = vmatpush1.msra.mxu0 %v419
        %441 = vmatprep.subr.mxu0 %v422
        %442 = vmatpush1.msra.mxu0 %v421
        %443 = vmatprep.subr.mxu0 %v424
        %444 = vmatpush1.msra.mxu0 %v423
        %445 = vmatprep.subr.mxu0 %v426
        %446 = vmatpush1.msra.mxu0 %v425
        %447 = vmatprep.subr.mxu0 0.0
        %448 = vmatpush1.msra.mxu0 0.0
        %449 = vmatprep.subr.mxu0 0.0
        %450 = vmatpush1.msra.mxu0 0.0
        %451 = vmatprep.subr.mxu0 0.0
        %452 = vmatpush1.msra.mxu0 0.0
        %453 = vmatprep.subr.mxu0 0.0
        %454 = vmatpush1.msra.mxu0 0.0
        %455 = vmatprep.subr.mxu0 0.0
        %456 = vmatpush1.msra.mxu0 0.0
        %457 = vmatprep.subr.mxu0 0.0
        %458 = vmatpush1.msra.mxu0 0.0
        %459 = vmatprep.subr.mxu0 0.0
        %460 = vmatpush1.msra.mxu0 0.0
        %461 = vmatprep.subr.mxu0 0.0
        %462 = vmatpush1.msra.mxu0 0.0
        %463 = vmatprep.subr.mxu0 0.0
        %464 = vmatpush1.msra.mxu0 0.0
        %465 = vmatprep.subr.mxu0 0.0
        %466 = vmatpush1.msra.mxu0 0.0
        %467 = vmatprep.subr.mxu0 0.0
        %468 = vmatpush1.msra.mxu0 0.0
        %469 = vmatprep.subr.mxu0 0.0
        %470 = vmatpush1.msra.mxu0 0.0
        %471 = vmatprep.subr.mxu0 0.0
        %472 = vmatpush1.msra.mxu0 0.0
        %473 = vmatprep.subr.mxu0 0.0
        %474 = vmatpush1.msra.mxu0 0.0
        %475 = vmatprep.subr.mxu0 0.0
        %476 = vmatpush1.msra.mxu0 0.0
        %477 = vmatprep.subr.mxu0 0.0
        %478 = vmatpush1.msra.mxu0 0.0
        %479 = vmatprep.subr.mxu0 0.0
        %480 = vmatpush1.msra.mxu0 0.0
        %481 = vmatprep.subr.mxu0 0.0
        %482 = vmatpush1.msra.mxu0 0.0
        %483 = vmatprep.subr.mxu0 0.0
        %484 = vmatpush1.msra.mxu0 0.0
        %485 = vmatprep.subr.mxu0 0.0
        %486 = vmatpush1.msra.mxu0 0.0
        %487 = vmatprep.subr.mxu0 0.0
        %488 = vmatpush1.msra.mxu0 0.0
        %489 = vmatprep.subr.mxu0 0.0
        %490 = vmatpush1.msra.mxu0 0.0
        %491 = vmatprep.subr.mxu0 0.0
        %492 = vmatpush1.msra.mxu0 0.0
        %493 = vmatprep.subr.mxu0 0.0
        %494 = vmatpush1.msra.mxu0 0.0
        %495 = vmatprep.mubr.f32.mxu0 0.0
        %496 = vmatmul.mubr.f32.gmra.mrb[0].mxu0 %v429
        %v497 = vpop.f32.mrb[0].mxu0
        %v498 = vadd.f32 0.0, %v497
        %v499 = vpop.f32.mrb[0].mxu0
        %v500 = vadd.f32 0.0, %v499
        %501 = vdwg.mxu0
        %502 = vst [vmem:[%s217] sm:$0xff] %v498
        %503 = vst [vmem:[%s217 + $0x8] sm:$0xff] %v500
        %s504 = sand.u32 %s137, 1
        %s505 = scalar_lea.sflag [#allocation3], %s504
        %s506 = sand.u32 %s137, 1
        %s507 = smul.addr %s506, 16
        %s508 = scalar_lea.vmem [#allocation2], %s507
        // Predicated region
        $region41: #{tpu_custom_call.1} parent=39 // pred_check
          %p509 = pneg %p147
        $region42: #{tpu_custom_call.1} parent=39 // pred_check_branch
          %511 = sbr.rel (%p509) target = $region44
        $region43: #{tpu_custom_call.1} parent=39 // pred_region
          %s513 = ssub.s32 256, 256
          %514 = vsyncadd %s505, %s513
          %s515 = smul.addr %s19, 2
          %s516 = smul.addr %s515, 128
          %s517 = scalar_lea.hbm %s5, %s516
          %s519 = sshll.u32 %s508, 4
          %s520 = int_to_ptr.vmem [resolvable:$true] %s519
          %522 = dma.vmem_to_hbm [thread:$0]  %s520, 256, %s517, %s505
        $region44: #{tpu_custom_call.1} parent=39 // pred_fallthru
          _
      $region40: #{tpu_custom_call.1} parent=5 // pred_fallthru
        _
      %p523 = scmp.le.s32.totalorder 2, %s14
      // Predicated region
      $region45: #{tpu_custom_call.1} parent=5 // pred_check
        %p524 = pneg %p523
      $region46: #{tpu_custom_call.1} parent=5 // pred_check_branch
        %526 = sbr.rel (%p524) target = $region48
      $region47: #{tpu_custom_call.1} parent=5 // pred_region
        %s527 = ssub.s32 %s14, 2
        // Predicated region
        $region49: #{tpu_custom_call.1} parent=47 // pred_check
          %p528 = pneg %p153
        $region50: #{tpu_custom_call.1} parent=47 // pred_check_branch
          %530 = sbr.rel (%p528) target = $region52
        $region51: #{tpu_custom_call.1} parent=47 // pred_region
          %s531 = sand.u32 %s138, 1
          %s532 = scalar_lea.sflag [#allocation3], %s531
          %s533 = sand.u32 %s138, 1
          %s534 = smul.addr %s533, 16
          %s535 = scalar_lea.vmem [#allocation2], %s534
          %536 = dma.done %s532, 256
        $region52: #{tpu_custom_call.1} parent=47 // pred_fallthru
          _
      $region48: #{tpu_custom_call.1} parent=5 // pred_fallthru
        _
    $region6: #{tpu_custom_call.1} parent=1 // loop_footer
      %s18 = sadd.s32 1, %s14
    $region7: #{tpu_custom_call.1} parent=1 // loop_footer_branch
      %13 = sbr.rel target = $region3
    $region8: #{tpu_custom_call.1} parent=1 // loop_exit
      _
    %537 = vsyncpa [#allocation3], 1
    %s538 = scalar_lea.sflag [#allocation3], 1
    %539 = vsyncpa %s538, 1

</llo_original>
